<compile_context>
chip_gen: v6e
topology: v6e:2x2x1
jax: 0.10.0
libtpu: 0.0.40
codegen_flags: <defaults>
</compile_context>

<pallas_src>
import math
from functools import partial

import jax
import jax.numpy as jnp
from jax.experimental import pallas as pl
from jax.experimental.pallas import tpu as pltpu


def _erf(x):
    """erf via Abramowitz & Stegun 7.1.26 (max abs error ~1.5e-7)."""
    a1, a2, a3, a4, a5 = (0.254829592, -0.284496736, 1.421413741,
                          -1.453152027, 1.061405429)
    p = 0.3275911
    ax = jnp.abs(x)
    t = 1.0 / (1.0 + p * ax)
    poly = t * (a1 + t * (a2 + t * (a3 + t * (a4 + t * a5))))
    y = 1.0 - poly * jnp.exp(-ax * ax)
    return jnp.where(x >= 0, y, -y)


def _gelu_exact(x):
    """PyTorch nn.GELU default: 0.5 * x * (1 + erf(x / sqrt(2)))."""
    return 0.5 * x * (1.0 + _erf(x * (1.0 / math.sqrt(2.0))))


def mlp_kernel(x_ref, w1_ref, b1_ref, w2_ref, b2_ref, o_ref):
    # x_ref: (block_m, D_in) tile of flattened tokens; weights fully resident.
    x = x_ref[...]
    h = jnp.dot(x, w1_ref[...], preferred_element_type=jnp.float32) + b1_ref[...]
    h = _gelu_exact(h)
    out = jnp.dot(h, w2_ref[...], preferred_element_type=jnp.float32) + b2_ref[...]
    # Dropout(drop) is identity at inference time.
    o_ref[...] = out.astype(o_ref.dtype)


def mlp_forward(x, params, *, block_m=None):
    """Applies the Mlp to x of shape (..., in_features)."""
    w1, b1, w2, b2 = params            # w: (in, hidden)/(hidden, out) pre-transposed
    d_in = x.shape[-1]
    hidden = w1.shape[1]
    d_out = w2.shape[1]
    assert w1.shape[0] == d_in and w2.shape[0] == hidden

    lead_shape = x.shape[:-1]
    x2 = x.reshape(-1, d_in)
    m = x2.shape[0]

    if block_m is None:
        # Big blocks, but keep >= 2 grid steps so both v7x TensorCores get work.
        half = (m + 1) // 2
        block_m = min(512, max(8, ((half + 7) // 8) * 8))

    num_blocks = -(-m // block_m)
    m_pad = num_blocks * block_m
    if m_pad != m:
        x2 = jnp.pad(x2, ((0, m_pad - m), (0, 0)))

    out = pl.pallas_call(
        mlp_kernel,
        out_shape=jax.ShapeDtypeStruct((m_pad, d_out), x.dtype),
        grid=(num_blocks,),
        in_specs=[
            pl.BlockSpec((block_m, d_in), lambda i: (i, 0)),   # x tile
            pl.BlockSpec((d_in, hidden), lambda i: (0, 0)),    # fc1 weight (resident)
            pl.BlockSpec((1, hidden), lambda i: (0, 0)),       # fc1 bias
            pl.BlockSpec((hidden, d_out), lambda i: (0, 0)),   # fc2 weight (resident)
            pl.BlockSpec((1, d_out), lambda i: (0, 0)),        # fc2 bias
        ],
        out_specs=pl.BlockSpec((block_m, d_out), lambda i: (i, 0)),
        compiler_params=pltpu.CompilerParams(
            dimension_semantics=("parallel",)),
    )(x2, w1, b1, w2, b2)

    if m_pad != m:
        out = out[:m]
    return out.reshape(*lead_shape, d_out)


def init_params(key, in_features, hidden_features, out_features):
    """Deterministic nn.Linear-style init (uniform +/- 1/sqrt(fan_in))."""
    k1w, k1b, k2w, k2b = jax.random.split(key, 4)

    def lin(kw, kb, fan_in, fan_out):
        bound = 1.0 / math.sqrt(fan_in)
        w = jax.random.uniform(kw, (fan_out, fan_in), jnp.float32, -bound, bound)
        b = jax.random.uniform(kb, (fan_out,), jnp.float32, -bound, bound)
        # Pre-transpose so the kernel computes x @ W; bias kept 2-D (1, fan_out).
        return jnp.asarray(w.T), b.reshape(1, fan_out)

    w1, b1 = lin(k1w, k1b, in_features, hidden_features)
    w2, b2 = lin(k2w, k2b, hidden_features, out_features)
    return w1, b1, w2, b2


def reference(x, params):
    """Pure-JAX reference mirroring the PyTorch forward (eval mode)."""
    w1, b1, w2, b2 = params
    h = x @ w1 + b1[0]
    h = jax.nn.gelu(h, approximate=False)     # nn.GELU default = exact erf GELU
    return h @ w2 + b2[0]


if __name__ == "__main__":
    B, N, in_features, hidden_features = 2, 8, 32, 128
    out_features = in_features

    root = jax.random.PRNGKey(0)
    k_in, k_par = jax.random.split(root)

    x = jax.random.normal(k_in, (B, N, in_features), jnp.float32)
    params = init_params(k_par, in_features, hidden_features, out_features)

    out = mlp_forward(x, params)
    out = jax.block_until_ready(out)

    ref = reference(x, params)
    assert out.shape == (B, N, out_features)
    assert jnp.allclose(out, ref, atol=1e-4, rtol=1e-4)

    print("KERNEL_OK")
</pallas_src>

<mosaic_0001>
module attributes {stable_mosaic.version = 11 : i64} {
  func.func @mlp_kernel(%arg0: i32, %arg1: memref<8x32xf32, #tpu.memory_space<vmem>>, %arg2: memref<32x128xf32, #tpu.memory_space<vmem>>, %arg3: memref<1x128xf32, #tpu.memory_space<vmem>>, %arg4: memref<128x32xf32, #tpu.memory_space<vmem>>, %arg5: memref<1x32xf32, #tpu.memory_space<vmem>>, %arg6: memref<8x32xf32, #tpu.memory_space<vmem>>) attributes {dimension_semantics = [#tpu.dimension_semantics<parallel>], iteration_bounds = array<i64: 2>, scalar_prefetch = 0 : i64, scratch_operands = 0 : i64, tpu.core_type = #tpu.core_type<tc>, window_params = [{transform_indices = @transform_0, window_bounds = array<i64: 8, 32>}, {pipeline_mode = #tpu.pipeline_mode<synchronous>, transform_indices = @transform_1, window_bounds = array<i64: 32, 128>}, {pipeline_mode = #tpu.pipeline_mode<synchronous>, transform_indices = @transform_2, window_bounds = array<i64: 1, 128>}, {pipeline_mode = #tpu.pipeline_mode<synchronous>, transform_indices = @transform_3, window_bounds = array<i64: 128, 32>}, {pipeline_mode = #tpu.pipeline_mode<synchronous>, transform_indices = @transform_4, window_bounds = array<i64: 1, 32>}, {transform_indices = @transform_5, window_bounds = array<i64: 8, 32>}]} {
    %c0 = arith.constant 0 : index
    %c0_0 = arith.constant 0 : index
    %0 = vector.load %arg1[%c0, %c0_0] : memref<8x32xf32, #tpu.memory_space<vmem>>, vector<8x32xf32>
    %c0_1 = arith.constant 0 : index
    %c0_2 = arith.constant 0 : index
    %1 = vector.load %arg2[%c0_1, %c0_2] : memref<32x128xf32, #tpu.memory_space<vmem>>, vector<32x128xf32>
    %cst = arith.constant dense<0.000000e+00> : vector<8x128xf32>
    %2 = tpu.matmul %0, %1, %cst {dimension_numbers = #tpu.dot_dimension_numbers<[1], [0], [0], [1], [0, 0, 1, 1], [], []>} : vector<8x32xf32>, vector<32x128xf32>, vector<8x128xf32> -> vector<8x128xf32>
    %c0_3 = arith.constant 0 : index
    %c0_4 = arith.constant 0 : index
    %3 = vector.load %arg3[%c0_3, %c0_4] : memref<1x128xf32, #tpu.memory_space<vmem>>, vector<1x128xf32>
    %4 = vector.broadcast %3 : vector<1x128xf32> to vector<8x128xf32>
    %5 = arith.addf %2, %4 : vector<8x128xf32>
    %cst_5 = arith.constant 5.000000e-01 : f32
    %6 = vector.broadcast %cst_5 : f32 to vector<8x128xf32>
    %7 = arith.mulf %6, %5 : vector<8x128xf32>
    %cst_6 = arith.constant 0.707106769 : f32
    %8 = vector.broadcast %cst_6 : f32 to vector<8x128xf32>
    %9 = arith.mulf %5, %8 : vector<8x128xf32>
    %10 = math.absf %9 : vector<8x128xf32>
    %cst_7 = arith.constant 0.327591091 : f32
    %11 = vector.broadcast %cst_7 : f32 to vector<8x128xf32>
    %12 = arith.mulf %11, %10 : vector<8x128xf32>
    %cst_8 = arith.constant 1.000000e+00 : f32
    %13 = vector.broadcast %cst_8 : f32 to vector<8x128xf32>
    %14 = arith.addf %13, %12 : vector<8x128xf32>
    %cst_9 = arith.constant 1.000000e+00 : f32
    %15 = vector.broadcast %cst_9 : f32 to vector<8x128xf32>
    %16 = arith.divf %15, %14 : vector<8x128xf32>
    %cst_10 = arith.constant 1.06140542 : f32
    %17 = vector.broadcast %cst_10 : f32 to vector<8x128xf32>
    %18 = arith.mulf %16, %17 : vector<8x128xf32>
    %cst_11 = arith.constant -1.45315206 : f32
    %19 = vector.broadcast %cst_11 : f32 to vector<8x128xf32>
    %20 = arith.addf %19, %18 : vector<8x128xf32>
    %21 = arith.mulf %16, %20 : vector<8x128xf32>
    %cst_12 = arith.constant 1.42141378 : f32
    %22 = vector.broadcast %cst_12 : f32 to vector<8x128xf32>
    %23 = arith.addf %22, %21 : vector<8x128xf32>
    %24 = arith.mulf %16, %23 : vector<8x128xf32>
    %cst_13 = arith.constant -0.284496725 : f32
    %25 = vector.broadcast %cst_13 : f32 to vector<8x128xf32>
    %26 = arith.addf %25, %24 : vector<8x128xf32>
    %27 = arith.mulf %16, %26 : vector<8x128xf32>
    %cst_14 = arith.constant 0.254829586 : f32
    %28 = vector.broadcast %cst_14 : f32 to vector<8x128xf32>
    %29 = arith.addf %28, %27 : vector<8x128xf32>
    %30 = arith.mulf %16, %29 : vector<8x128xf32>
    %cst_15 = arith.constant 0.000000e+00 : f32
    %31 = vector.broadcast %cst_15 : f32 to vector<8x128xf32>
    %32 = arith.subf %31, %10 : vector<8x128xf32>
    %33 = arith.mulf %32, %10 : vector<8x128xf32>
    %34 = math.exp %33 : vector<8x128xf32>
    %35 = arith.mulf %30, %34 : vector<8x128xf32>
    %cst_16 = arith.constant 1.000000e+00 : f32
    %36 = vector.broadcast %cst_16 : f32 to vector<8x128xf32>
    %37 = arith.subf %36, %35 : vector<8x128xf32>
    %cst_17 = arith.constant 0.000000e+00 : f32
    %38 = vector.broadcast %cst_17 : f32 to vector<8x128xf32>
    %39 = arith.cmpf oge, %9, %38 : vector<8x128xf32>
    %cst_18 = arith.constant 0.000000e+00 : f32
    %40 = vector.broadcast %cst_18 : f32 to vector<8x128xf32>
    %41 = arith.subf %40, %37 : vector<8x128xf32>
    %42 = arith.select %39, %37, %41 : vector<8x128xi1>, vector<8x128xf32>
    %cst_19 = arith.constant 1.000000e+00 : f32
    %43 = vector.broadcast %cst_19 : f32 to vector<8x128xf32>
    %44 = arith.addf %43, %42 : vector<8x128xf32>
    %45 = arith.mulf %7, %44 : vector<8x128xf32>
    %c0_20 = arith.constant 0 : index
    %c0_21 = arith.constant 0 : index
    %46 = vector.load %arg4[%c0_20, %c0_21] : memref<128x32xf32, #tpu.memory_space<vmem>>, vector<128x32xf32>
    %cst_22 = arith.constant dense<0.000000e+00> : vector<8x32xf32>
    %47 = tpu.matmul %45, %46, %cst_22 {dimension_numbers = #tpu.dot_dimension_numbers<[1], [0], [0], [1], [0, 0, 1, 1], [], []>} : vector<8x128xf32>, vector<128x32xf32>, vector<8x32xf32> -> vector<8x32xf32>
    %c0_23 = arith.constant 0 : index
    %c0_24 = arith.constant 0 : index
    %48 = vector.load %arg5[%c0_23, %c0_24] : memref<1x32xf32, #tpu.memory_space<vmem>>, vector<1x32xf32>
    %49 = vector.broadcast %48 : vector<1x32xf32> to vector<8x32xf32>
    %50 = arith.addf %47, %49 : vector<8x32xf32>
    %c0_25 = arith.constant 0 : index
    %c0_26 = arith.constant 0 : index
    %51 = vector.load %arg6[%c0_25, %c0_26] : memref<8x32xf32, #tpu.memory_space<vmem>>, vector<8x32xf32>
    tpu.vector_store %arg6[%c0_25, %c0_26], %50 {strides = array<i32>} : memref<8x32xf32, #tpu.memory_space<vmem>>, vector<8x32xf32>,
    return
  }
  func.func @transform_0(%arg0: i32) -> (i32, i32) {
    %c0_i32 = arith.constant 0 : i32
    %c0_i32_0 = arith.constant 0 : i32
    return %arg0, %c0_i32 : i32, i32
  }
  func.func @transform_1(%arg0: i32) -> (i32, i32) {
    %c0_i32 = arith.constant 0 : i32
    %c0_i32_0 = arith.constant 0 : i32
    %c0_i32_1 = arith.constant 0 : i32
    return %c0_i32, %c0_i32_0 : i32, i32
  }
  func.func @transform_2(%arg0: i32) -> (i32, i32) {
    %c0_i32 = arith.constant 0 : i32
    %c0_i32_0 = arith.constant 0 : i32
    %c0_i32_1 = arith.constant 0 : i32
    return %c0_i32, %c0_i32_0 : i32, i32
  }
  func.func @transform_3(%arg0: i32) -> (i32, i32) {
    %c0_i32 = arith.constant 0 : i32
    %c0_i32_0 = arith.constant 0 : i32
    %c0_i32_1 = arith.constant 0 : i32
    return %c0_i32, %c0_i32_0 : i32, i32
  }
  func.func @transform_4(%arg0: i32) -> (i32, i32) {
    %c0_i32 = arith.constant 0 : i32
    %c0_i32_0 = arith.constant 0 : i32
    %c0_i32_1 = arith.constant 0 : i32
    return %c0_i32, %c0_i32_0 : i32, i32
  }
  func.func @transform_5(%arg0: i32) -> (i32, i32) {
    %c0_i32 = arith.constant 0 : i32
    %c0_i32_0 = arith.constant 0 : i32
    return %arg0, %c0_i32 : i32, i32
  }
}

</mosaic_0001>

<llo_original>
// kernel: tpu_custom_call.1
$region0: #{tpu_custom_call.1}
  #allocation0 [shape = 'u32[]', space=smem, size = 0x4, offset = 0x4, fixed_abs, tag = 'smem constant byte address 0x4 - core index']
  #allocation1 [shape = 'u32[144,128]{1,0:T(1,128)}', space=vmem, size = 0x12000, scoped, tag = 'internal scratch']
  %s0 = inlined_call_operand.vmem [shape: f32[16,32], index: 0, kind: input, shape index: {}]
  %s1 = inlined_call_operand.vmem [shape: f32[32,128], index: 1, kind: input, shape index: {}]
  %s2 = inlined_call_operand.vmem [shape: f32[1,128], index: 2, kind: input, shape index: {}]
  %s3 = inlined_call_operand.vmem [shape: f32[128,32], index: 3, kind: input, shape index: {}]
  %s4 = inlined_call_operand.vmem [shape: f32[1,32], index: 4, kind: input, shape index: {}]
  %s5 = inlined_call_operand.hbm [shape: f32[16,32], index: 5, kind: output, shape index: {}]
  %s6 = sld [smem:[#allocation0]]
  $region53: #{tpu_custom_call.1} parent=0
    _
  %s8 = ssub.s32 1, %s6
  %s9 = scalar_select 0, %s8, %s6
  $region1: #{tpu_custom_call.1} parent=0
    #allocation2 [shape = 'u8[8192]{0}', space=vmem, size = 0x2000, scoped, tag = 'output window, operand 0']
    #allocation3 [shape = 's32[2]{0}', space=sflag, size = 0x8, scoped, tag = 'scoped memory for tpu_custom_call.1']
    %10 = vsyncpa [#allocation3], 0
    %s11 = scalar_lea.sflag [#allocation3], 1
    %12 = vsyncpa %s11, 0
    loop: start=0, step=1, limit=4
    $region2: #{tpu_custom_call.1} parent=1 // loop_pre_header
      _
    $region3: #{tpu_custom_call.1} parent=1 // loop_header
      %s14 = sphi 0, %s18
      %p15 = scmp.ge.s32.totalorder %s14, 4
      %s24 = sphi 0, %s26
      %s27 = sphi 0, %s24
      %s28 = sphi 0, %s27
      %s44 = sphi 0, %s28
      %s48 = sphi 0, %s48
      %s50 = sphi 0, %s48
      %s51 = sphi 0, %s50
      %s65 = sphi 0, %s51
      %s69 = sphi 0, %s69
      %s71 = sphi 0, %s69
      %s72 = sphi 0, %s71
      %s86 = sphi 0, %s72
      %s90 = sphi 0, %s90
      %s92 = sphi 0, %s90
      %s93 = sphi 0, %s92
      %s107 = sphi 0, %s93
      %s111 = sphi 0, %s111
      %s113 = sphi 0, %s111
      %s114 = sphi 0, %s113
      %s128 = sphi 0, %s114
      %s134 = sphi 0, %s136
      %s137 = sphi 0, %s134
      %s138 = sphi 0, %s137
      %s154 = sphi 0, %s138
    $region4: #{tpu_custom_call.1} parent=1 // loop_header_branch
      %17 = sbr.rel (%p15) target = $region8
    $region5: #{tpu_custom_call.1} parent=1 // loop_body
      %s19 = ssub.s32 %s14, 1
      %s20 = ssub.s32 %s14, 2
      %s21 = sadd.s32 %s14, 1
      %s22 = ssub.s32 %s14, %s21
      %p23 = scmp.eq.s32.totalorder %s22, 0
      %s25 = sadd.s32 %s24, 1
      %s26 = scalar_select %p23, %s24, %s25
      %p29 = pneg %p23
      %p30 = scmp.eq.s32.totalorder %s14, 1
      %p31 = por %p29, %p30
      %p32 = scmp.ne.s32.totalorder %s24, %s27
      %p33 = scmp.eq.s32.totalorder %s14, 0
      %p34 = por %p32, %p33
      %p35 = scmp.ne.s32.totalorder %s24, %s27
      %p36 = scmp.eq.s32.totalorder %s19, 1
      %p37 = por %p35, %p36
      %p38 = scmp.ne.s32.totalorder %s27, %s28
      %p39 = scmp.eq.s32.totalorder %s19, 0
      %p40 = por %p38, %p39
      %p41 = scmp.ne.s32.totalorder %s27, %s28
      %p42 = scmp.eq.s32.totalorder %s20, 1
      %p43 = por %p41, %p42
      %p45 = scmp.ne.s32.totalorder %s28, %s44
      %p46 = scmp.eq.s32.totalorder %s20, 0
      %p47 = por %p45, %p46
      %s49 = sadd.s32 %s48, 1
      %p52 = scmp.eq.s32.totalorder %s14, 1
      %p53 = scmp.ne.s32.totalorder %s48, %s50
      %p54 = scmp.eq.s32.totalorder %s14, 0
      %p55 = por %p53, %p54
      %p56 = scmp.ne.s32.totalorder %s48, %s50
      %p57 = scmp.eq.s32.totalorder %s19, 1
      %p58 = por %p56, %p57
      %p59 = scmp.ne.s32.totalorder %s50, %s51
      %p60 = scmp.eq.s32.totalorder %s19, 0
      %p61 = por %p59, %p60
      %p62 = scmp.ne.s32.totalorder %s50, %s51
      %p63 = scmp.eq.s32.totalorder %s20, 1
      %p64 = por %p62, %p63
      %p66 = scmp.ne.s32.totalorder %s51, %s65
      %p67 = scmp.eq.s32.totalorder %s20, 0
      %p68 = por %p66, %p67
      %s70 = sadd.s32 %s69, 1
      %p73 = scmp.eq.s32.totalorder %s14, 1
      %p74 = scmp.ne.s32.totalorder %s69, %s71
      %p75 = scmp.eq.s32.totalorder %s14, 0
      %p76 = por %p74, %p75
      %p77 = scmp.ne.s32.totalorder %s69, %s71
      %p78 = scmp.eq.s32.totalorder %s19, 1
      %p79 = por %p77, %p78
      %p80 = scmp.ne.s32.totalorder %s71, %s72
      %p81 = scmp.eq.s32.totalorder %s19, 0
      %p82 = por %p80, %p81
      %p83 = scmp.ne.s32.totalorder %s71, %s72
      %p84 = scmp.eq.s32.totalorder %s20, 1
      %p85 = por %p83, %p84
      %p87 = scmp.ne.s32.totalorder %s72, %s86
      %p88 = scmp.eq.s32.totalorder %s20, 0
      %p89 = por %p87, %p88
      %s91 = sadd.s32 %s90, 1
      %p94 = scmp.eq.s32.totalorder %s14, 1
      %p95 = scmp.ne.s32.totalorder %s90, %s92
      %p96 = scmp.eq.s32.totalorder %s14, 0
      %p97 = por %p95, %p96
      %p98 = scmp.ne.s32.totalorder %s90, %s92
      %p99 = scmp.eq.s32.totalorder %s19, 1
      %p100 = por %p98, %p99
      %p101 = scmp.ne.s32.totalorder %s92, %s93
      %p102 = scmp.eq.s32.totalorder %s19, 0
      %p103 = por %p101, %p102
      %p104 = scmp.ne.s32.totalorder %s92, %s93
      %p105 = scmp.eq.s32.totalorder %s20, 1
      %p106 = por %p104, %p105
      %p108 = scmp.ne.s32.totalorder %s93, %s107
      %p109 = scmp.eq.s32.totalorder %s20, 0
      %p110 = por %p108, %p109
      %s112 = sadd.s32 %s111, 1
      %p115 = scmp.eq.s32.totalorder %s14, 1
      %p116 = scmp.ne.s32.totalorder %s111, %s113
      %p117 = scmp.eq.s32.totalorder %s14, 0
      %p118 = por %p116, %p117
      %p119 = scmp.ne.s32.totalorder %s111, %s113
      %p120 = scmp.eq.s32.totalorder %s19, 1
      %p121 = por %p119, %p120
      %p122 = scmp.ne.s32.totalorder %s113, %s114
      %p123 = scmp.eq.s32.totalorder %s19, 0
      %p124 = por %p122, %p123
      %p125 = scmp.ne.s32.totalorder %s113, %s114
      %p126 = scmp.eq.s32.totalorder %s20, 1
      %p127 = por %p125, %p126
      %p129 = scmp.ne.s32.totalorder %s114, %s128
      %p130 = scmp.eq.s32.totalorder %s20, 0
      %p131 = por %p129, %p130
      %s132 = ssub.s32 %s14, %s21
      %p133 = scmp.eq.s32.totalorder %s132, 0
      %s135 = sadd.s32 %s134, 1
      %s136 = scalar_select %p133, %s134, %s135
      %p139 = pneg %p133
      %p140 = scmp.eq.s32.totalorder %s14, 1
      %p141 = por %p139, %p140
      %p142 = scmp.ne.s32.totalorder %s134, %s137
      %p143 = scmp.eq.s32.totalorder %s14, 0
      %p144 = por %p142, %p143
      %p145 = scmp.ne.s32.totalorder %s134, %s137
      %p146 = scmp.eq.s32.totalorder %s19, 1
      %p147 = por %p145, %p146
      %p148 = scmp.ne.s32.totalorder %s137, %s138
      %p149 = scmp.eq.s32.totalorder %s19, 0
      %p150 = por %p148, %p149
      %p151 = scmp.ne.s32.totalorder %s137, %s138
      %p152 = scmp.eq.s32.totalorder %s20, 1
      %p153 = por %p151, %p152
      %p155 = scmp.ne.s32.totalorder %s138, %s154
      %p156 = scmp.eq.s32.totalorder %s20, 0
      %p157 = por %p155, %p156
      %p158 = scmp.le.s32.totalorder 1, %s14
      %p159 = scmp.lt.s32.totalorder %s14, 3
      %p160 = pnand %p158, %p159
      %p161 = pneg %p160
      // Predicated region
      $region9: #{tpu_custom_call.1} parent=5 // pred_check
        _
      $region10: #{tpu_custom_call.1} parent=5 // pred_check_branch
        %163 = sbr.rel (%p160) target = $region12
      $region11: #{tpu_custom_call.1} parent=5 // pred_region
        %s164 = ssub.s32 %s14, 1
        // Predicated region
        $region13: #{tpu_custom_call.1} parent=11 // pred_check
          %p165 = pneg %p61
        $region14: #{tpu_custom_call.1} parent=11 // pred_check_branch
          %167 = sbr.rel (%p165) target = $region16
        $region15: #{tpu_custom_call.1} parent=11 // pred_region
          _
        $region16: #{tpu_custom_call.1} parent=11 // pred_fallthru
          _
        // Predicated region
        $region17: #{tpu_custom_call.1} parent=11 // pred_check
          %p168 = pneg %p82
        $region18: #{tpu_custom_call.1} parent=11 // pred_check_branch
          %170 = sbr.rel (%p168) target = $region20
        $region19: #{tpu_custom_call.1} parent=11 // pred_region
          _
        $region20: #{tpu_custom_call.1} parent=11 // pred_fallthru
          _
        // Predicated region
        $region21: #{tpu_custom_call.1} parent=11 // pred_check
          %p171 = pneg %p103
        $region22: #{tpu_custom_call.1} parent=11 // pred_check_branch
          %173 = sbr.rel (%p171) target = $region24
        $region23: #{tpu_custom_call.1} parent=11 // pred_region
          _
        $region24: #{tpu_custom_call.1} parent=11 // pred_fallthru
          _
        // Predicated region
        $region25: #{tpu_custom_call.1} parent=11 // pred_check
          %p174 = pneg %p124
        $region26: #{tpu_custom_call.1} parent=11 // pred_check_branch
          %176 = sbr.rel (%p174) target = $region28
        $region27: #{tpu_custom_call.1} parent=11 // pred_region
          _
        $region28: #{tpu_custom_call.1} parent=11 // pred_fallthru
          _
      $region12: #{tpu_custom_call.1} parent=5 // pred_fallthru
        _
      %p177 = scmp.lt.s32.totalorder %s14, 2
      // Predicated region
      $region29: #{tpu_custom_call.1} parent=5 // pred_check
        %p178 = pneg %p177
      $region30: #{tpu_custom_call.1} parent=5 // pred_check_branch
        %180 = sbr.rel (%p178) target = $region32
      $region31: #{tpu_custom_call.1} parent=5 // pred_region
        // Predicated region
        $region33: #{tpu_custom_call.1} parent=31 // pred_check
          %p181 = pneg %p34
        $region34: #{tpu_custom_call.1} parent=31 // pred_check_branch
          %183 = sbr.rel (%p181) target = $region36
        $region35: #{tpu_custom_call.1} parent=31 // pred_region
          %p184 = scmp.lt.s32.totalorder %s14, 1
          %s185 = scalar_select %p184, %s14, 1
          %s186 = smul.addr %s185, 8
          %s187 = scalar_lea.vmem %s0, %s186
        $region36: #{tpu_custom_call.1} parent=31 // pred_fallthru
          _
      $region32: #{tpu_custom_call.1} parent=5 // pred_fallthru
        _
      %p188 = scmp.le.s32.totalorder 1, %s14
      %p189 = scmp.lt.s32.totalorder %s14, 3
      %p190 = pnand %p188, %p189
      %p191 = pneg %p190
      // Predicated region
      $region37: #{tpu_custom_call.1} parent=5 // pred_check
        _
      $region38: #{tpu_custom_call.1} parent=5 // pred_check_branch
        %193 = sbr.rel (%p190) target = $region40
      $region39: #{tpu_custom_call.1} parent=5 // pred_region
        %s194 = ssub.s32 %s14, 1
        %p195 = scmp.lt.s32.totalorder %s19, 1
        %s196 = scalar_select %p195, %s19, 1
        %s197 = smul.addr %s196, 8
        %s198 = scalar_lea.vmem %s0, %s197
        %p199 = pneg %p40
        %p200 = pneg %p37
        %p201 = pneg %p61
        %p202 = pneg %p58
        %p203 = pneg %p82
        %p204 = pneg %p79
        %p205 = pneg %p103
        %p206 = pneg %p100
        %p207 = pneg %p124
        %p208 = pneg %p121
        %p209 = pneg %p150
        %p210 = pneg %p147
        %s211 = sand.u32 %s137, 1
        %s212 = scalar_lea.sflag [#allocation3], %s211
        %s213 = sand.u32 %s137, 1
        %s214 = smul.addr %s213, 8
        %s215 = scalar_lea.vmem [#allocation2], %s214
        %p216 = scmp.lt.s32.totalorder %s19, 1
        %s217 = scalar_select %p216, %s19, 1
        %s218 = smul.addr %s217, 8
        %s219 = scalar_lea.vmem %s0, %s218
        %v220 = vld [vmem:[%s219] sm:$0xff]
        %v221 = vld [vmem:[%s1] sm:$0xff]
        %v222 = vld [vmem:[%s1 + $0x8] sm:$0xff]
        %v223 = vld [vmem:[%s1 + $0x10] sm:$0xff]
        %v224 = vld [vmem:[%s1 + $0x18] sm:$0xff]
        %v225 = vld [vmem:[%s2] sm:$0x1]
        %v227 = vlaneseq
        %v228 = vshrl.u32 %v227, 7
        %v229 = vsub.s32 0, %v228
        %v230 = vrot.slane %v225, %v229
        %vm232 = vcmask 261120
        %v234 = vsel %vm232, %v220, 0
        %236 = vmatprep.subr.mxu0 0.0
        %237 = vmatpush1.msra.mxu0 0.0
        %238 = vmatprep.subr.mxu0 0.0
        %239 = vmatpush1.msra.mxu0 0.0
        %240 = vmatprep.subr.mxu0 0.0
        %241 = vmatpush1.msra.mxu0 0.0
        %242 = vmatprep.subr.mxu0 0.0
        %243 = vmatpush1.msra.mxu0 0.0
        %244 = vmatprep.subr.mxu0 0.0
        %245 = vmatpush1.msra.mxu0 0.0
        %246 = vmatprep.subr.mxu0 0.0
        %247 = vmatpush1.msra.mxu0 0.0
        %248 = vmatprep.subr.mxu0 0.0
        %249 = vmatpush1.msra.mxu0 0.0
        %250 = vmatprep.subr.mxu0 0.0
        %251 = vmatpush1.msra.mxu0 0.0
        %252 = vmatprep.subr.mxu0 0.0
        %253 = vmatpush1.msra.mxu0 0.0
        %254 = vmatprep.subr.mxu0 0.0
        %255 = vmatpush1.msra.mxu0 0.0
        %256 = vmatprep.subr.mxu0 0.0
        %257 = vmatpush1.msra.mxu0 0.0
        %258 = vmatprep.subr.mxu0 0.0
        %259 = vmatpush1.msra.mxu0 0.0
        %260 = vmatprep.subr.mxu0 0.0
        %261 = vmatpush1.msra.mxu0 %v224
        %262 = vmatprep.subr.mxu0 0.0
        %263 = vmatpush1.msra.mxu0 %v223
        %264 = vmatprep.subr.mxu0 0.0
        %265 = vmatpush1.msra.mxu0 %v222
        %266 = vmatprep.subr.mxu0 0.0
        %267 = vmatpush1.msra.mxu0 %v221
        %268 = vmatprep.subr.mxu0 0.0
        %269 = vmatpush2.msra.mxu0 0.0
        %270 = vmatprep.subr.mxu0 0.0
        %271 = vmatpush2.msra.mxu0 0.0
        %272 = vmatprep.subr.mxu0 0.0
        %273 = vmatpush2.msra.mxu0 0.0
        %274 = vmatprep.subr.mxu0 0.0
        %275 = vmatpush2.msra.mxu0 0.0
        %276 = vmatprep.subr.mxu0 0.0
        %277 = vmatpush2.msra.mxu0 0.0
        %278 = vmatprep.subr.mxu0 0.0
        %279 = vmatpush2.msra.mxu0 0.0
        %280 = vmatprep.subr.mxu0 0.0
        %281 = vmatpush2.msra.mxu0 0.0
        %282 = vmatprep.subr.mxu0 0.0
        %283 = vmatpush2.msra.mxu0 0.0
        %284 = vmatprep.subr.mxu0 0.0
        %285 = vmatpush2.msra.mxu0 0.0
        %286 = vmatprep.subr.mxu0 0.0
        %287 = vmatpush2.msra.mxu0 0.0
        %288 = vmatprep.subr.mxu0 0.0
        %289 = vmatpush2.msra.mxu0 0.0
        %290 = vmatprep.subr.mxu0 0.0
        %291 = vmatpush2.msra.mxu0 0.0
        %292 = vmatprep.subr.mxu0 0.0
        %293 = vmatpush2.msra.mxu0 0.0
        %294 = vmatprep.subr.mxu0 0.0
        %295 = vmatpush2.msra.mxu0 0.0
        %296 = vmatprep.subr.mxu0 0.0
        %297 = vmatpush2.msra.mxu0 0.0
        %298 = vmatprep.subr.mxu0 0.0
        %299 = vmatpush2.msra.mxu0 0.0
        %300 = vmatprep.mubr.f32.mxu0 0.0
        %301 = vmatmul.mubr.f32.gmra.mxu0 %v234
        %v302 = vpop.f32.mrf.mxu0
        %v303 = vadd.f32 %v230, %v302
        %v304 = vpop.f32.mrf.mxu0
        %305 = vdwg.mxu0
        %v306 = vmul.f32 %v303, 0.5
        %v307 = vmul.f32 %v303, 0.70710677
        %v308 = vand.u32 2147483647, %v307
        %v309 = vmul.f32 %v308, 0.3275911
        %v310 = vadd.f32 %v309, 1.0
        %v311 = vrcp.pop %v310
        %v312 = vmul.f32 1.0, %v311
        %v313 = vmul.f32 %v312, 1.0614054
        %v314 = vadd.f32 %v313, -1.4531521
        %v315 = vmul.f32 %v312, %v314
        %v316 = vadd.f32 %v315, 1.4214138
        %v317 = vmul.f32 %v312, %v316
        %v318 = vadd.f32 %v317, -0.28449672
        %v319 = vmul.f32 %v312, %v318
        %v320 = vadd.f32 %v319, 0.2548296
        %v321 = vmul.f32 %v312, %v320
        %v322 = vsub.f32 0.0, %v308
        %v323 = vmul.f32 %v322, %v308
        %v324 = vmul.f32 %v323, 1.442695
        %v325 = vpow.pop %v324
        %v326 = vmul.f32 %v321, %v325
        %v327 = vsub.f32 1.0, %v326
        %vm328 = vcmp.ge.f32.partialorder %v307, 0.0
        %v329 = vsub.f32 0.0, %v327
        %v330 = vsel %vm328, %v327, %v329
        %v331 = vadd.f32 %v330, 1.0
        %v332 = vmul.f32 %v306, %v331
        %v333 = vld [vmem:[%s3] sm:$0xff]
        %v334 = vld [vmem:[%s3 + $0x8] sm:$0xff]
        %v335 = vld [vmem:[%s3 + $0x10] sm:$0xff]
        %v336 = vld [vmem:[%s3 + $0x18] sm:$0xff]
        %v337 = vld [vmem:[%s3 + $0x20] sm:$0xff]
        %v338 = vld [vmem:[%s3 + $0x28] sm:$0xff]
        %v339 = vld [vmem:[%s3 + $0x30] sm:$0xff]
        %v340 = vld [vmem:[%s3 + $0x38] sm:$0xff]
        %v341 = vld [vmem:[%s3 + $0x40] sm:$0xff]
        %v342 = vld [vmem:[%s3 + $0x48] sm:$0xff]
        %v343 = vld [vmem:[%s3 + $0x50] sm:$0xff]
        %v344 = vld [vmem:[%s3 + $0x58] sm:$0xff]
        %v345 = vld [vmem:[%s3 + $0x60] sm:$0xff]
        %v346 = vld [vmem:[%s3 + $0x68] sm:$0xff]
        %v347 = vld [vmem:[%s3 + $0x70] sm:$0xff]
        %v348 = vld [vmem:[%s3 + $0x78] sm:$0xff]
        %v349 = vld [vmem:[%s4] sm:$0x1]
        %v351 = vlaneseq
        %v352 = vshrl.u32 %v351, 7
        %v353 = vsub.s32 0, %v352
        %v354 = vrot.slane %v349, %v353
        %356 = vmatprep.subr.mxu0 0.0
        %357 = vmatpush1.msra.mxu0 %v348
        %358 = vmatprep.subr.mxu0 0.0
        %359 = vmatpush1.msra.mxu0 %v347
        %360 = vmatprep.subr.mxu0 0.0
        %361 = vmatpush1.msra.mxu0 %v346
        %362 = vmatprep.subr.mxu0 0.0
        %363 = vmatpush1.msra.mxu0 %v345
        %364 = vmatprep.subr.mxu0 0.0
        %365 = vmatpush1.msra.mxu0 %v344
        %366 = vmatprep.subr.mxu0 0.0
        %367 = vmatpush1.msra.mxu0 %v343
        %368 = vmatprep.subr.mxu0 0.0
        %369 = vmatpush1.msra.mxu0 %v342
        %370 = vmatprep.subr.mxu0 0.0
        %371 = vmatpush1.msra.mxu0 %v341
        %372 = vmatprep.subr.mxu0 0.0
        %373 = vmatpush1.msra.mxu0 %v340
        %374 = vmatprep.subr.mxu0 0.0
        %375 = vmatpush1.msra.mxu0 %v339
        %376 = vmatprep.subr.mxu0 0.0
        %377 = vmatpush1.msra.mxu0 %v338
        %378 = vmatprep.subr.mxu0 0.0
        %379 = vmatpush1.msra.mxu0 %v337
        %380 = vmatprep.subr.mxu0 0.0
        %381 = vmatpush1.msra.mxu0 %v336
        %382 = vmatprep.subr.mxu0 0.0
        %383 = vmatpush1.msra.mxu0 %v335
        %384 = vmatprep.subr.mxu0 0.0
        %385 = vmatpush1.msra.mxu0 %v334
        %386 = vmatprep.subr.mxu0 0.0
        %387 = vmatpush1.msra.mxu0 %v333
        %388 = vmatprep.subr.mxu0 0.0
        %389 = vmatpush2.msra.mxu0 0.0
        %390 = vmatprep.subr.mxu0 0.0
        %391 = vmatpush2.msra.mxu0 0.0
        %392 = vmatprep.subr.mxu0 0.0
        %393 = vmatpush2.msra.mxu0 0.0
        %394 = vmatprep.subr.mxu0 0.0
        %395 = vmatpush2.msra.mxu0 0.0
        %396 = vmatprep.subr.mxu0 0.0
        %397 = vmatpush2.msra.mxu0 0.0
        %398 = vmatprep.subr.mxu0 0.0
        %399 = vmatpush2.msra.mxu0 0.0
        %400 = vmatprep.subr.mxu0 0.0
        %401 = vmatpush2.msra.mxu0 0.0
        %402 = vmatprep.subr.mxu0 0.0
        %403 = vmatpush2.msra.mxu0 0.0
        %404 = vmatprep.subr.mxu0 0.0
        %405 = vmatpush2.msra.mxu0 0.0
        %406 = vmatprep.subr.mxu0 0.0
        %407 = vmatpush2.msra.mxu0 0.0
        %408 = vmatprep.subr.mxu0 0.0
        %409 = vmatpush2.msra.mxu0 0.0
        %410 = vmatprep.subr.mxu0 0.0
        %411 = vmatpush2.msra.mxu0 0.0
        %412 = vmatprep.subr.mxu0 0.0
        %413 = vmatpush2.msra.mxu0 0.0
        %414 = vmatprep.subr.mxu0 0.0
        %415 = vmatpush2.msra.mxu0 0.0
        %416 = vmatprep.subr.mxu0 0.0
        %417 = vmatpush2.msra.mxu0 0.0
        %418 = vmatprep.subr.mxu0 0.0
        %419 = vmatpush2.msra.mxu0 0.0
        %420 = vmatprep.mubr.f32.mxu0 0.0
        %421 = vmatmul.mubr.f32.gmra.mxu0 %v332
        %v422 = vpop.f32.mrf.mxu0
        %v423 = vadd.f32 %v354, %v422
        %v424 = vpop.f32.mrf.mxu0
        %425 = vdwg.mxu0
        %426 = vst.msk [vmem:[%s215] sm:$0xff] %vm232, %v423
        %s427 = sand.u32 %s137, 1
        %s428 = scalar_lea.sflag [#allocation3], %s427
        %s429 = sand.u32 %s137, 1
        %s430 = smul.addr %s429, 8
        %s431 = scalar_lea.vmem [#allocation2], %s430
        // Predicated region
        $region41: #{tpu_custom_call.1} parent=39 // pred_check
          %p432 = pneg %p147
        $region42: #{tpu_custom_call.1} parent=39 // pred_check_branch
          %434 = sbr.rel (%p432) target = $region44
        $region43: #{tpu_custom_call.1} parent=39 // pred_region
          %s436 = ssub.s32 128, 128
          %437 = vsyncadd %s428, %s436
          %s438 = smul.addr %s19, 128
          %s439 = scalar_lea.hbm %s5, %s438
          %s441 = sshll.u32 %s431, 4
          %s442 = int_to_ptr.vmem [resolvable:$true] %s441
          %444 = dma.vmem_to_hbm [thread:$0]  %s442, 128, %s439, %s428
        $region44: #{tpu_custom_call.1} parent=39 // pred_fallthru
          _
      $region40: #{tpu_custom_call.1} parent=5 // pred_fallthru
        _
      %p445 = scmp.le.s32.totalorder 2, %s14
      // Predicated region
      $region45: #{tpu_custom_call.1} parent=5 // pred_check
        %p446 = pneg %p445
      $region46: #{tpu_custom_call.1} parent=5 // pred_check_branch
        %448 = sbr.rel (%p446) target = $region48
      $region47: #{tpu_custom_call.1} parent=5 // pred_region
        %s449 = ssub.s32 %s14, 2
        // Predicated region
        $region49: #{tpu_custom_call.1} parent=47 // pred_check
          %p450 = pneg %p153
        $region50: #{tpu_custom_call.1} parent=47 // pred_check_branch
          %452 = sbr.rel (%p450) target = $region52
        $region51: #{tpu_custom_call.1} parent=47 // pred_region
          %s453 = sand.u32 %s138, 1
          %s454 = scalar_lea.sflag [#allocation3], %s453
          %s455 = sand.u32 %s138, 1
          %s456 = smul.addr %s455, 8
          %s457 = scalar_lea.vmem [#allocation2], %s456
          %458 = dma.done %s454, 128
        $region52: #{tpu_custom_call.1} parent=47 // pred_fallthru
          _
      $region48: #{tpu_custom_call.1} parent=5 // pred_fallthru
        _
    $region6: #{tpu_custom_call.1} parent=1 // loop_footer
      %s18 = sadd.s32 1, %s14
    $region7: #{tpu_custom_call.1} parent=1 // loop_footer_branch
      %13 = sbr.rel target = $region3
    $region8: #{tpu_custom_call.1} parent=1 // loop_exit
      _
    %459 = vsyncpa [#allocation3], 1
    %s460 = scalar_lea.sflag [#allocation3], 1
    %461 = vsyncpa %s460, 1

</llo_original>
